<compile_context>
chip_gen: v7x
topology: tpu7x:2x2x1
jax: 0.10.0
libtpu: 0.0.40
codegen_flags: <defaults>
</compile_context>

<pallas_src>
import itertools
from enum import Enum

import numpy as np
import jax
import jax.numpy as jnp
from jax.experimental import pallas as pl
from jax.experimental.pallas import tpu as pltpu


class HungarianMode(Enum):
    Seq = 0
    DoubleSeq = 1
    SeqMat = 2


# Full-array VMEM residency (KB-scale operands); documents + guarantees placement.
_VMEM = pl.BlockSpec(memory_space=pltpu.MemorySpace.VMEM)


# ----------------------------------------------------------------------------
# Pallas kernel 1: batched pairwise Euclidean distance (torch.cdist, p=2)
#   VPU broadcast diff-square: exact, no MXU, no transposes, a handful of vregs.
# ----------------------------------------------------------------------------
def _cdist_kernel(p_ref, t_ref, o_ref):
    p = p_ref[...]                                   # (B, M, D)
    t = t_ref[...]                                   # (B, N, D)
    d = p[:, :, None, :] - t[:, None, :, :]          # (B, M, N, D)  VPU broadcast
    sq = jnp.sum(d * d, axis=-1)                     # (B, M, N)     lane reduce
    o_ref[...] = jnp.sqrt(sq)


def cdist_pallas(pred, target):
    B, M, D = pred.shape
    _, N, _ = target.shape
    flops = B * M * N * (3 * D + 1)
    bytes_accessed = 4 * (B * M * D + B * N * D + B * M * N)
    # TODO(synk): if M/N/D grow, add a ("parallel", ...) grid over B / M-tiles
    # (uses the 2nd TensorCore on v7x) with lane-dense (multiple-of-128) N tiles and
    # a vmem_limit_bytes plan re-derived for v7x's 64 MiB VMEM; at the current
    # KB-scale shapes a grid-less call avoids the ~0.35us per-grid-step cost.
    return pl.pallas_call(
        _cdist_kernel,
        out_shape=jax.ShapeDtypeStruct((B, M, N), jnp.float32),
        in_specs=[_VMEM, _VMEM],
        out_specs=_VMEM,
        cost_estimate=pl.CostEstimate(
            flops=flops, transcendentals=B * M * N, bytes_accessed=bytes_accessed),
    )(pred, target)


# ----------------------------------------------------------------------------
# Pallas kernel 2: fused matched-pair gather + MSE + BCE + final mean
#   Inputs: pred (B,N,D), target (B,N,D), perm one-hot (B,N,N).
#   The gather target[b, col_idx[b,i], :] is a permutation-matrix apply (VPU),
#   BCE uses a full-width lane mask (no 1-lane slice), output is ONE scalar.
# ----------------------------------------------------------------------------
def _matched_loss_kernel(p_ref, t_ref, perm_ref, o_ref):
    p = p_ref[...]                                   # (B, N, D)
    t = t_ref[...]                                   # (B, N, D)
    pm = perm_ref[...]                               # (B, N, N) one-hot rows
    B, N, D = p.shape

    # matched target: tm[b, i, :] = target[b, col_idx[b, i], :]
    tm = jnp.sum(pm[:, :, :, None] * t[:, None, :, :], axis=2)   # (B, N, D)

    diff = p - tm
    sq = diff * diff                                 # MSE terms (all D features)

    # BCE on the last feature column, computed lane-dense with a mask.
    lane = jax.lax.broadcasted_iota(jnp.int32, (B, N, D), 2)
    is_last = lane == (D - 1)
    p_s = jnp.where(is_last, p, 0.5)                 # keep logs finite off-mask
    t_s = jnp.where(is_last, tm, 0.5)
    log_p = jnp.maximum(jnp.log(p_s), -100.0)        # torch BCE log clamp
    log_1mp = jnp.maximum(jnp.log(1.0 - p_s), -100.0)
    bce = jnp.where(is_last, -(t_s * log_p + (1.0 - t_s) * log_1mp), 0.0)

    # reference: mean(stack([MSE_b, BCE_b]_b)) = (sum_b MSE_b + sum_b BCE_b) / (2B)
    weighted = sq * (1.0 / float(N * D)) + bce * (1.0 / float(N))
    r = jnp.sum(weighted, axis=-1)                   # (B, N)
    r = jnp.sum(r, axis=-1, keepdims=True)           # (B, 1)
    r = jnp.sum(r, axis=0, keepdims=True)            # (1, 1)
    o_ref[...] = r * (1.0 / float(2 * B))


def matched_loss_pallas(pred, target, perm_onehot_bnn):
    B, N, D = pred.shape
    flops = 3 * B * N * N * D + 12 * B * N * D
    bytes_accessed = 4 * (2 * B * N * D + B * N * N + 1)
    return pl.pallas_call(
        _matched_loss_kernel,
        out_shape=jax.ShapeDtypeStruct((1, 1), jnp.float32),
        in_specs=[_VMEM, _VMEM, _VMEM],
        out_specs=_VMEM,
        cost_estimate=pl.CostEstimate(
            flops=flops, transcendentals=2 * B * N * D,
            bytes_accessed=bytes_accessed),
    )(pred, target, perm_onehot_bnn)


# ----------------------------------------------------------------------------
# Whole forward as one jitted device program (no host sync anywhere).
# ----------------------------------------------------------------------------
@jax.jit
def _hungarian_forward(pred, target, perm_idx, perm_score_onehot):
    B, M, D = pred.shape
    _, N, _ = target.shape
    # Pallas: batched pairwise Euclidean cost matrices
    cost = cdist_pallas(pred, target)                            # (B, M, N)
    # On-device exact assignment (square case): score every permutation.
    #   scores[b, p] = sum_i cost[b, i, perm[p, i]]  via one-hot contraction.
    scores = jnp.einsum("bk,pk->bp", cost.reshape(B, M * N),
                        perm_score_onehot)                       # (B, N!)
    best = jnp.argmin(scores, axis=-1)                           # (B,)
    col_idx = jnp.take(perm_idx, best, axis=0)                   # (B, N)
    perm_mat = jax.nn.one_hot(col_idx, N, dtype=jnp.float32)     # (B, N, N)
    # Pallas: fused matched-pair gather + MSE + BCE + final mean (one scalar)
    return matched_loss_pallas(pred, target, perm_mat)[0, 0]


# ----------------------------------------------------------------------------
# Module-equivalent wrapper
# ----------------------------------------------------------------------------
class HungarianLoss:
    def __init__(self, mode: HungarianMode, base_loss: str = "mse",
                 feature_weight=None):
        assert base_loss == "mse", "demo uses MSE base loss (module default)"
        self.mode = mode  # unused in forward (as in the reference)
        if feature_weight is None:
            self.f_w = jnp.ones((1, 1, 1), dtype=jnp.float32)   # defined, unused
        else:
            self.f_w = jnp.asarray(feature_weight, dtype=jnp.float32).reshape(1, 1, -1)
        self._perm_n = None
        self._perm_idx = None
        self._perm_score_onehot = None

    def _build_perm_tables(self, n):
        # Exhaustive permutation table: exact optimal assignment for square N <= 8.
        # TODO(synk): general / large-N linear_sum_assignment is a sequential
        # combinatorial algorithm with no clean Pallas equivalent; it would fall
        # back to a host scipy round trip.
        assert n <= 8, "on-device brute-force assignment supports N <= 8"
        perms = np.array(list(itertools.permutations(range(n))), dtype=np.int32)
        num = perms.shape[0]
        onehot = np.zeros((num, n * n), dtype=np.float32)
        rows = np.repeat(np.arange(num), n)
        cols = np.tile(np.arange(n), num) * n + perms.reshape(-1)
        onehot[rows, cols] = 1.0
        self._perm_n = n
        self._perm_idx = jnp.asarray(perms)                      # (n!, n) int32
        self._perm_score_onehot = jnp.asarray(onehot)            # (n!, n*n) f32

    def __call__(self, pred_segs, target_segs):
        # pred_segs: list of B arrays [M, D]; target_segs: [B, N, D]
        target = jnp.asarray(target_segs, dtype=jnp.float32)
        B, N, D = target.shape
        pred = jnp.stack([jnp.asarray(p, dtype=jnp.float32) for p in pred_segs],
                         axis=0)                                 # (B, M, D)
        M = pred.shape[1]
        assert M == N, "square assignment assumed (M == N)"
        if self._perm_n != N:
            self._build_perm_tables(N)
        # TODO(synk): the unmatched-rows BCE branch of the reference is dead for
        # square assignments (row_ind always covers range(N)); for M != N it needs
        # a ragged data-dependent gather with no clean static Pallas tiling.
        return _hungarian_forward(pred, target, self._perm_idx,
                                  self._perm_score_onehot)


# ----------------------------------------------------------------------------
if __name__ == "__main__":
    B, N, D = 2, 8, 16   # small shapes; M == N (square assignment)
    key = jax.random.PRNGKey(0)
    k1, k2, k3, k4 = jax.random.split(key, 4)

    pred = jax.random.normal(k1, (B, N, D), dtype=jnp.float32)
    # last column of predictions is a probability in (0, 1)
    pred = pred.at[..., -1].set(jax.nn.sigmoid(jax.random.normal(k2, (B, N))))

    target = jax.random.normal(k3, (B, N, D), dtype=jnp.float32)
    # last column of targets is a binary match label in {0, 1}
    target = target.at[..., -1].set(
        jax.random.bernoulli(k4, 0.5, (B, N)).astype(jnp.float32))

    pred_segs = [pred[b] for b in range(B)]

    loss_fn = HungarianLoss(HungarianMode.Seq, base_loss="mse")
    loss = loss_fn(pred_segs, target)
    loss = jax.block_until_ready(loss)

    assert jnp.isfinite(loss), "loss is not finite"
    print("KERNEL_OK")
</pallas_src>

<mosaic_0001>
module attributes {stable_mosaic.version = 11 : i64} {
  func.func @_cdist_kernel(%arg0: memref<2x8x16xf32, #tpu.memory_space<vmem>>, %arg1: memref<2x8x16xf32, #tpu.memory_space<vmem>>, %arg2: memref<2x8x8xf32, #tpu.memory_space<vmem>>) attributes {dimension_semantics = [], scalar_prefetch = 0 : i64, scratch_operands = 0 : i64, tpu.core_type = #tpu.core_type<tc>} {
    %c0 = arith.constant 0 : index
    %c0_0 = arith.constant 0 : index
    %c0_1 = arith.constant 0 : index
    %0 = vector.load %arg0[%c0, %c0_0, %c0_1] : memref<2x8x16xf32, #tpu.memory_space<vmem>>, vector<2x8x16xf32>
    %c0_2 = arith.constant 0 : index
    %c0_3 = arith.constant 0 : index
    %c0_4 = arith.constant 0 : index
    %1 = vector.load %arg1[%c0_2, %c0_3, %c0_4] : memref<2x8x16xf32, #tpu.memory_space<vmem>>, vector<2x8x16xf32>
    %2 = vector.shape_cast %0 : vector<2x8x16xf32> to vector<2x8x1x16xf32>
    %3 = vector.shape_cast %1 : vector<2x8x16xf32> to vector<2x1x8x16xf32>
    %4 = vector.broadcast %2 : vector<2x8x1x16xf32> to vector<2x8x8x16xf32>
    %5 = vector.broadcast %3 : vector<2x1x8x16xf32> to vector<2x8x8x16xf32>
    %6 = arith.subf %4, %5 : vector<2x8x8x16xf32>
    %7 = arith.mulf %6, %6 : vector<2x8x8x16xf32>
    %cst = arith.constant dense<0.000000e+00> : vector<2x8x8xf32>
    %8 = vector.multi_reduction <add>, %7, %cst [3] : vector<2x8x8x16xf32> to vector<2x8x8xf32>
    %9 = math.sqrt %8 : vector<2x8x8xf32>
    %c0_5 = arith.constant 0 : index
    %c0_6 = arith.constant 0 : index
    %c0_7 = arith.constant 0 : index
    %10 = vector.load %arg2[%c0_5, %c0_6, %c0_7] : memref<2x8x8xf32, #tpu.memory_space<vmem>>, vector<2x8x8xf32>
    tpu.vector_store %arg2[%c0_5, %c0_6, %c0_7], %9 {strides = array<i32>} : memref<2x8x8xf32, #tpu.memory_space<vmem>>, vector<2x8x8xf32>,
    return
  }
}

module attributes {stable_mosaic.version = 11 : i64} {
  func.func @_matched_loss_kernel(%arg0: memref<2x8x16xf32, #tpu.memory_space<vmem>>, %arg1: memref<2x8x16xf32, #tpu.memory_space<vmem>>, %arg2: memref<2x8x8xf32, #tpu.memory_space<vmem>>, %arg3: memref<1x1xf32, #tpu.memory_space<vmem>>) attributes {dimension_semantics = [], scalar_prefetch = 0 : i64, scratch_operands = 0 : i64, tpu.core_type = #tpu.core_type<tc>} {
    %c0 = arith.constant 0 : index
    %c0_0 = arith.constant 0 : index
    %c0_1 = arith.constant 0 : index
    %0 = vector.load %arg0[%c0, %c0_0, %c0_1] : memref<2x8x16xf32, #tpu.memory_space<vmem>>, vector<2x8x16xf32>
    %c0_2 = arith.constant 0 : index
    %c0_3 = arith.constant 0 : index
    %c0_4 = arith.constant 0 : index
    %1 = vector.load %arg1[%c0_2, %c0_3, %c0_4] : memref<2x8x16xf32, #tpu.memory_space<vmem>>, vector<2x8x16xf32>
    %c0_5 = arith.constant 0 : index
    %c0_6 = arith.constant 0 : index
    %c0_7 = arith.constant 0 : index
    %2 = vector.load %arg2[%c0_5, %c0_6, %c0_7] : memref<2x8x8xf32, #tpu.memory_space<vmem>>, vector<2x8x8xf32>
    %3 = vector.shape_cast %2 : vector<2x8x8xf32> to vector<2x8x8x1xf32>
    %4 = vector.shape_cast %1 : vector<2x8x16xf32> to vector<2x1x8x16xf32>
    %5 = vector.broadcast %3 : vector<2x8x8x1xf32> to vector<2x8x8x16xf32>
    %6 = vector.broadcast %4 : vector<2x1x8x16xf32> to vector<2x8x8x16xf32>
    %7 = arith.mulf %5, %6 : vector<2x8x8x16xf32>
    %cst = arith.constant dense<0.000000e+00> : vector<2x8x16xf32>
    %8 = vector.multi_reduction <add>, %7, %cst [2] : vector<2x8x8x16xf32> to vector<2x8x16xf32>
    %9 = arith.subf %0, %8 : vector<2x8x16xf32>
    %10 = arith.mulf %9, %9 : vector<2x8x16xf32>
    %11 = tpu.iota {dimensions = array<i32: 2>} : vector<2x8x16xi32>
    %c15_i32 = arith.constant 15 : i32
    %12 = vector.broadcast %c15_i32 : i32 to vector<2x8x16xi32>
    %13 = arith.cmpi eq, %11, %12 : vector<2x8x16xi32>
    %cst_8 = arith.constant 5.000000e-01 : f32
    %14 = vector.broadcast %cst_8 : f32 to vector<2x8x16xf32>
    %15 = arith.select %13, %0, %14 : vector<2x8x16xi1>, vector<2x8x16xf32>
    %cst_9 = arith.constant 5.000000e-01 : f32
    %16 = vector.broadcast %cst_9 : f32 to vector<2x8x16xf32>
    %17 = arith.select %13, %8, %16 : vector<2x8x16xi1>, vector<2x8x16xf32>
    %18 = math.log %15 : vector<2x8x16xf32>
    %cst_10 = arith.constant -1.000000e+02 : f32
    %19 = vector.broadcast %cst_10 : f32 to vector<2x8x16xf32>
    %20 = arith.maximumf %18, %19 : vector<2x8x16xf32>
    %cst_11 = arith.constant 1.000000e+00 : f32
    %21 = vector.broadcast %cst_11 : f32 to vector<2x8x16xf32>
    %22 = arith.subf %21, %15 : vector<2x8x16xf32>
    %23 = math.log %22 : vector<2x8x16xf32>
    %cst_12 = arith.constant -1.000000e+02 : f32
    %24 = vector.broadcast %cst_12 : f32 to vector<2x8x16xf32>
    %25 = arith.maximumf %23, %24 : vector<2x8x16xf32>
    %26 = arith.mulf %17, %20 : vector<2x8x16xf32>
    %cst_13 = arith.constant 1.000000e+00 : f32
    %27 = vector.broadcast %cst_13 : f32 to vector<2x8x16xf32>
    %28 = arith.subf %27, %17 : vector<2x8x16xf32>
    %29 = arith.mulf %28, %25 : vector<2x8x16xf32>
    %30 = arith.addf %26, %29 : vector<2x8x16xf32>
    %cst_14 = arith.constant 0.000000e+00 : f32
    %31 = vector.broadcast %cst_14 : f32 to vector<2x8x16xf32>
    %32 = arith.subf %31, %30 : vector<2x8x16xf32>
    %cst_15 = arith.constant 0.000000e+00 : f32
    %33 = vector.broadcast %cst_15 : f32 to vector<2x8x16xf32>
    %34 = arith.select %13, %32, %33 : vector<2x8x16xi1>, vector<2x8x16xf32>
    %cst_16 = arith.constant 7.812500e-03 : f32
    %35 = vector.broadcast %cst_16 : f32 to vector<2x8x16xf32>
    %36 = arith.mulf %10, %35 : vector<2x8x16xf32>
    %cst_17 = arith.constant 1.250000e-01 : f32
    %37 = vector.broadcast %cst_17 : f32 to vector<2x8x16xf32>
    %38 = arith.mulf %34, %37 : vector<2x8x16xf32>
    %39 = arith.addf %36, %38 : vector<2x8x16xf32>
    %cst_18 = arith.constant dense<0.000000e+00> : vector<2x8xf32>
    %40 = vector.multi_reduction <add>, %39, %cst_18 [2] : vector<2x8x16xf32> to vector<2x8xf32>
    %cst_19 = arith.constant dense<0.000000e+00> : vector<2xf32>
    %41 = vector.multi_reduction <add>, %40, %cst_19 [1] : vector<2x8xf32> to vector<2xf32>
    %42 = vector.shape_cast %41 : vector<2xf32> to vector<2x1xf32>
    %cst_20 = arith.constant dense<0.000000e+00> : vector<1xf32>
    %43 = vector.multi_reduction <add>, %42, %cst_20 [0] : vector<2x1xf32> to vector<1xf32>
    %44 = vector.shape_cast %43 : vector<1xf32> to vector<1x1xf32>
    %cst_21 = arith.constant 2.500000e-01 : f32
    %45 = vector.broadcast %cst_21 : f32 to vector<1x1xf32>
    %46 = arith.mulf %44, %45 : vector<1x1xf32>
    %c0_22 = arith.constant 0 : index
    %c0_23 = arith.constant 0 : index
    %47 = vector.load %arg3[%c0_22, %c0_23] : memref<1x1xf32, #tpu.memory_space<vmem>>, vector<1x1xf32>
    tpu.vector_store %arg3[%c0_22, %c0_23], %46 {strides = array<i32>} : memref<1x1xf32, #tpu.memory_space<vmem>>, vector<1x1xf32>,
    return
  }
}

</mosaic_0001>

<llo_original>
// kernel: _hungarian_forward.2
$region0: #{_hungarian_forward.2}
  #allocation0 [shape = 'u32[]', space=smem, size = 0x4, offset = 0x4, fixed_abs, tag = 'smem constant byte address 0x4 - core index']
  #allocation1 [shape = 'u32[144,128]{1,0:T(1,128)}', space=vmem, size = 0x12000, scoped, tag = 'internal scratch']
  %s0 = inlined_call_operand.hbm [shape: f32[2,8,16], index: 0, kind: input, shape index: {}]
  %s1 = inlined_call_operand.hbm [shape: f32[2,8,16], index: 1, kind: input, shape index: {}]
  %s2 = inlined_call_operand.vmem [shape: f32[2,8,8], index: 2, kind: output, shape index: {}]
  %s3 = sld [smem:[#allocation0]]
  $region26: #{_hungarian_forward.2} parent=0
    _
  %s5 = ssub.s32 1, %s3
  %s6 = scalar_select 0, %s5, %s3
  $region1: #{_hungarian_forward.2} parent=0
    #allocation2 [shape = 'u8[8192]{0}', space=vmem, size = 0x2000, scoped, tag = 'input window, operand 0, single buffered']
    #allocation3 [shape = 's32[1]{0}', space=sflag, size = 0x4, scoped, tag = 'scoped memory for _hungarian_forward.2']
    #allocation4 [shape = 'u8[8192]{0}', space=vmem, size = 0x2000, scoped, tag = 'input window, operand 1, single buffered']
    #allocation5 [shape = 's32[1]{0}', space=sflag, size = 0x4, scoped, tag = 'scoped memory for _hungarian_forward.2']
    %7 = vsyncpa [#allocation3], 0
    %8 = vsyncpa [#allocation5], 0
    // Predicated region
    $region2: #{_hungarian_forward.2} parent=1 // pred_check
      _
    $region3: #{_hungarian_forward.2} parent=1 // pred_check_branch
      %10 = sbr.rel (0) target = $region5
    $region4: #{_hungarian_forward.2} parent=1 // pred_region
      %s12 = ssub.s32 256, 256
      %13 = vsyncadd [#allocation3], %s12
      %s14 = sshll.u32 [#allocation2], 4
      %s15 = int_to_ptr.vmem [resolvable:$true] %s14
      %20 = dma.hbm_to_vmem [thread:$0]  %s0, 256, %s15, [#allocation3], 128, 128, 8
    $region5: #{_hungarian_forward.2} parent=1 // pred_fallthru
      _
    // Predicated region
    $region6: #{_hungarian_forward.2} parent=1 // pred_check
      _
    $region7: #{_hungarian_forward.2} parent=1 // pred_check_branch
      %22 = sbr.rel (0) target = $region9
    $region8: #{_hungarian_forward.2} parent=1 // pred_region
      %s24 = ssub.s32 256, 256
      %25 = vsyncadd [#allocation5], %s24
      %s26 = sshll.u32 [#allocation4], 4
      %s27 = int_to_ptr.vmem [resolvable:$true] %s26
      %32 = dma.hbm_to_vmem [thread:$0]  %s1, 256, %s27, [#allocation5], 128, 128, 8
    $region9: #{_hungarian_forward.2} parent=1 // pred_fallthru
      _
    // Predicated region
    $region10: #{_hungarian_forward.2} parent=1 // pred_check
      _
    $region11: #{_hungarian_forward.2} parent=1 // pred_check_branch
      %34 = sbr.rel (0) target = $region13
    $region12: #{_hungarian_forward.2} parent=1 // pred_region
      %35 = dma.done [#allocation3], 256
    $region13: #{_hungarian_forward.2} parent=1 // pred_fallthru
      _
    // Predicated region
    $region14: #{_hungarian_forward.2} parent=1 // pred_check
      _
    $region15: #{_hungarian_forward.2} parent=1 // pred_check_branch
      %37 = sbr.rel (0) target = $region17
    $region16: #{_hungarian_forward.2} parent=1 // pred_region
      %38 = dma.done [#allocation5], 256
    $region17: #{_hungarian_forward.2} parent=1 // pred_fallthru
      _
    %v39 = vld [vmem:[#allocation2] sm:$0xff]
    %v40 = vld [vmem:[#allocation2 + $0x8] sm:$0xff]
    %v41 = vld [vmem:[#allocation4] sm:$0xff]
    %v42 = vld [vmem:[#allocation4 + $0x8] sm:$0xff]
    %v45 = vcombine.high %v39, %v39
    %v47 = vunpack.c.l.s4 1966171168
    %v48 = vunpack.c.0.s8 %v47
    %v49 = vlaneseq
    %v50 = vshrl.u32 %v49, 7
    %v51 = vsub.s32 %v48, %v50
    %v52 = vrot.slane %v39, %v51
    %v54 = vunpack.c.l.s4 1966171168
    %v55 = vunpack.c.0.s8 %v54
    %v56 = vlaneseq
    %v57 = vshrl.u32 %v56, 7
    %v58 = vsub.s32 %v55, %v57
    %v59 = vrot.slane %v45, %v58
    %v60 = vcombine.high %v52, %v52
    %v61 = vcombine.high %v59, %v59
    %v63 = vunpack.c.l.s4 1966171168
    %v64 = vunpack.c.0.s8 %v63
    %v65 = vlaneseq
    %v66 = vshrl.u32 %v65, 7
    %v67 = vsub.s32 %v64, %v66
    %v68 = vrot.slane %v52, %v67
    %v70 = vunpack.c.l.s4 1966171168
    %v71 = vunpack.c.0.s8 %v70
    %v72 = vlaneseq
    %v73 = vshrl.u32 %v72, 7
    %v74 = vsub.s32 %v71, %v73
    %v75 = vrot.slane %v59, %v74
    %v77 = vunpack.c.l.s4 1966171168
    %v78 = vunpack.c.0.s8 %v77
    %v79 = vlaneseq
    %v80 = vshrl.u32 %v79, 7
    %v81 = vsub.s32 %v78, %v80
    %v82 = vrot.slane %v60, %v81
    %v84 = vunpack.c.l.s4 1966171168
    %v85 = vunpack.c.0.s8 %v84
    %v86 = vlaneseq
    %v87 = vshrl.u32 %v86, 7
    %v88 = vsub.s32 %v85, %v87
    %v89 = vrot.slane %v61, %v88
    %v90 = vcombine.high %v68, %v68
    %v91 = vcombine.high %v75, %v75
    %v92 = vcombine.high %v82, %v82
    %v93 = vcombine.high %v89, %v89
    %v94 = vcombine.high %v40, %v40
    %v96 = vunpack.c.l.s4 1966171168
    %v97 = vunpack.c.0.s8 %v96
    %v98 = vlaneseq
    %v99 = vshrl.u32 %v98, 7
    %v100 = vsub.s32 %v97, %v99
    %v101 = vrot.slane %v40, %v100
    %v103 = vunpack.c.l.s4 1966171168
    %v104 = vunpack.c.0.s8 %v103
    %v105 = vlaneseq
    %v106 = vshrl.u32 %v105, 7
    %v107 = vsub.s32 %v104, %v106
    %v108 = vrot.slane %v94, %v107
    %v109 = vcombine.high %v101, %v101
    %v110 = vcombine.high %v108, %v108
    %v112 = vunpack.c.l.s4 1966171168
    %v113 = vunpack.c.0.s8 %v112
    %v114 = vlaneseq
    %v115 = vshrl.u32 %v114, 7
    %v116 = vsub.s32 %v113, %v115
    %v117 = vrot.slane %v101, %v116
    %v119 = vunpack.c.l.s4 1966171168
    %v120 = vunpack.c.0.s8 %v119
    %v121 = vlaneseq
    %v122 = vshrl.u32 %v121, 7
    %v123 = vsub.s32 %v120, %v122
    %v124 = vrot.slane %v108, %v123
    %v126 = vunpack.c.l.s4 1966171168
    %v127 = vunpack.c.0.s8 %v126
    %v128 = vlaneseq
    %v129 = vshrl.u32 %v128, 7
    %v130 = vsub.s32 %v127, %v129
    %v131 = vrot.slane %v109, %v130
    %v133 = vunpack.c.l.s4 1966171168
    %v134 = vunpack.c.0.s8 %v133
    %v135 = vlaneseq
    %v136 = vshrl.u32 %v135, 7
    %v137 = vsub.s32 %v134, %v136
    %v138 = vrot.slane %v110, %v137
    %v139 = vcombine.high %v117, %v117
    %v140 = vcombine.high %v124, %v124
    %v141 = vcombine.high %v131, %v131
    %v142 = vcombine.high %v138, %v138
    %v143 = vlaneseq
    %v144 = vshrl.u32 %v143, 7
    %v145 = vsub.s32 0, %v144
    %v146 = vrot.slane %v68, %v145
    %v147 = vlaneseq
    %v148 = vshrl.u32 %v147, 7
    %v149 = vsub.s32 0, %v148
    %v150 = vrot.slane %v82, %v149
    %v151 = vlaneseq
    %v152 = vshrl.u32 %v151, 7
    %v153 = vsub.s32 0, %v152
    %v154 = vrot.slane %v90, %v153
    %v155 = vlaneseq
    %v156 = vshrl.u32 %v155, 7
    %v157 = vsub.s32 0, %v156
    %v158 = vrot.slane %v92, %v157
    %v159 = vlaneseq
    %v160 = vshrl.u32 %v159, 7
    %v161 = vsub.s32 0, %v160
    %v162 = vrot.slane %v75, %v161
    %v163 = vlaneseq
    %v164 = vshrl.u32 %v163, 7
    %v165 = vsub.s32 0, %v164
    %v166 = vrot.slane %v89, %v165
    %v167 = vlaneseq
    %v168 = vshrl.u32 %v167, 7
    %v169 = vsub.s32 0, %v168
    %v170 = vrot.slane %v91, %v169
    %v171 = vlaneseq
    %v172 = vshrl.u32 %v171, 7
    %v173 = vsub.s32 0, %v172
    %v174 = vrot.slane %v93, %v173
    %v175 = vlaneseq
    %v176 = vshrl.u32 %v175, 7
    %v177 = vsub.s32 0, %v176
    %v178 = vrot.slane %v117, %v177
    %v179 = vlaneseq
    %v180 = vshrl.u32 %v179, 7
    %v181 = vsub.s32 0, %v180
    %v182 = vrot.slane %v131, %v181
    %v183 = vlaneseq
    %v184 = vshrl.u32 %v183, 7
    %v185 = vsub.s32 0, %v184
    %v186 = vrot.slane %v139, %v185
    %v187 = vlaneseq
    %v188 = vshrl.u32 %v187, 7
    %v189 = vsub.s32 0, %v188
    %v190 = vrot.slane %v141, %v189
    %v191 = vlaneseq
    %v192 = vshrl.u32 %v191, 7
    %v193 = vsub.s32 0, %v192
    %v194 = vrot.slane %v124, %v193
    %v195 = vlaneseq
    %v196 = vshrl.u32 %v195, 7
    %v197 = vsub.s32 0, %v196
    %v198 = vrot.slane %v138, %v197
    %v199 = vlaneseq
    %v200 = vshrl.u32 %v199, 7
    %v201 = vsub.s32 0, %v200
    %v202 = vrot.slane %v140, %v201
    %v203 = vlaneseq
    %v204 = vshrl.u32 %v203, 7
    %v205 = vsub.s32 0, %v204
    %v206 = vrot.slane %v142, %v205
    %v223 = vsub.f32 %v146, %v41
    %v224 = vsub.f32 %v150, %v41
    %v225 = vsub.f32 %v154, %v41
    %v226 = vsub.f32 %v158, %v41
    %v227 = vsub.f32 %v162, %v41
    %v228 = vsub.f32 %v166, %v41
    %v229 = vsub.f32 %v170, %v41
    %v230 = vsub.f32 %v174, %v41
    %v231 = vsub.f32 %v178, %v42
    %v232 = vsub.f32 %v182, %v42
    %v233 = vsub.f32 %v186, %v42
    %v234 = vsub.f32 %v190, %v42
    %v235 = vsub.f32 %v194, %v42
    %v236 = vsub.f32 %v198, %v42
    %v237 = vsub.f32 %v202, %v42
    %v238 = vsub.f32 %v206, %v42
    %v239 = vmul.f32 %v223, %v223
    %v240 = vmul.f32 %v224, %v224
    %v241 = vmul.f32 %v225, %v225
    %v242 = vmul.f32 %v226, %v226
    %v243 = vmul.f32 %v227, %v227
    %v244 = vmul.f32 %v228, %v228
    %v245 = vmul.f32 %v229, %v229
    %v246 = vmul.f32 %v230, %v230
    %v247 = vmul.f32 %v231, %v231
    %v248 = vmul.f32 %v232, %v232
    %v249 = vmul.f32 %v233, %v233
    %v250 = vmul.f32 %v234, %v234
    %v251 = vmul.f32 %v235, %v235
    %v252 = vmul.f32 %v236, %v236
    %v253 = vmul.f32 %v237, %v237
    %v254 = vmul.f32 %v238, %v238
    %vm255 = vcmask 130048
    %v256 = vsel %vm255, %v239, 0.0
    %257 = vadd.xlane.f32.xlu0 %v256
    %v258 = vpop.xlane.xlu0 %257
    %v259 = vsel %vm255, %v240, 0.0
    %260 = vadd.xlane.f32.xlu0 %v259
    %v261 = vpop.xlane.xlu0 %260
    %v262 = vsel %vm255, %v241, 0.0
    %263 = vadd.xlane.f32.xlu0 %v262
    %v264 = vpop.xlane.xlu0 %263
    %v265 = vsel %vm255, %v242, 0.0
    %266 = vadd.xlane.f32.xlu0 %v265
    %v267 = vpop.xlane.xlu0 %266
    %v268 = vsel %vm255, %v243, 0.0
    %269 = vadd.xlane.f32.xlu0 %v268
    %v270 = vpop.xlane.xlu0 %269
    %v271 = vsel %vm255, %v244, 0.0
    %272 = vadd.xlane.f32.xlu0 %v271
    %v273 = vpop.xlane.xlu0 %272
    %v274 = vsel %vm255, %v245, 0.0
    %275 = vadd.xlane.f32.xlu0 %v274
    %v276 = vpop.xlane.xlu0 %275
    %v277 = vsel %vm255, %v246, 0.0
    %278 = vadd.xlane.f32.xlu0 %v277
    %v279 = vpop.xlane.xlu0 %278
    %v280 = vsel %vm255, %v247, 0.0
    %281 = vadd.xlane.f32.xlu0 %v280
    %v282 = vpop.xlane.xlu0 %281
    %v283 = vsel %vm255, %v248, 0.0
    %284 = vadd.xlane.f32.xlu0 %v283
    %v285 = vpop.xlane.xlu0 %284
    %v286 = vsel %vm255, %v249, 0.0
    %287 = vadd.xlane.f32.xlu0 %v286
    %v288 = vpop.xlane.xlu0 %287
    %v289 = vsel %vm255, %v250, 0.0
    %290 = vadd.xlane.f32.xlu0 %v289
    %v291 = vpop.xlane.xlu0 %290
    %v292 = vsel %vm255, %v251, 0.0
    %293 = vadd.xlane.f32.xlu0 %v292
    %v294 = vpop.xlane.xlu0 %293
    %v295 = vsel %vm255, %v252, 0.0
    %296 = vadd.xlane.f32.xlu0 %v295
    %v297 = vpop.xlane.xlu0 %296
    %v298 = vsel %vm255, %v253, 0.0
    %299 = vadd.xlane.f32.xlu0 %v298
    %v300 = vpop.xlane.xlu0 %299
    %v301 = vsel %vm255, %v254, 0.0
    %302 = vadd.xlane.f32.xlu0 %v301
    %v303 = vpop.xlane.xlu0 %302
    %v304 = vrsqrt.pop %v258
    %v305 = vmul.f32 %v258, %v304
    %vm306 = vcmp.eq.f32.partialorder %v258, inf
    %v307 = vsel %vm306, %v258, %v305
    %vm308 = vcmp.eq.f32.partialorder %v258, 0.0
    %v309 = vand.u32 %v258, 2147483648
    %v310 = vsel %vm308, %v309, %v307
    %v311 = vrsqrt.pop %v261
    %v312 = vmul.f32 %v261, %v311
    %vm313 = vcmp.eq.f32.partialorder %v261, inf
    %v314 = vsel %vm313, %v261, %v312
    %vm315 = vcmp.eq.f32.partialorder %v261, 0.0
    %v316 = vand.u32 %v261, 2147483648
    %v317 = vsel %vm315, %v316, %v314
    %v318 = vrsqrt.pop %v264
    %v319 = vmul.f32 %v264, %v318
    %vm320 = vcmp.eq.f32.partialorder %v264, inf
    %v321 = vsel %vm320, %v264, %v319
    %vm322 = vcmp.eq.f32.partialorder %v264, 0.0
    %v323 = vand.u32 %v264, 2147483648
    %v324 = vsel %vm322, %v323, %v321
    %v325 = vrsqrt.pop %v267
    %v326 = vmul.f32 %v267, %v325
    %vm327 = vcmp.eq.f32.partialorder %v267, inf
    %v328 = vsel %vm327, %v267, %v326
    %vm329 = vcmp.eq.f32.partialorder %v267, 0.0
    %v330 = vand.u32 %v267, 2147483648
    %v331 = vsel %vm329, %v330, %v328
    %v332 = vrsqrt.pop %v270
    %v333 = vmul.f32 %v270, %v332
    %vm334 = vcmp.eq.f32.partialorder %v270, inf
    %v335 = vsel %vm334, %v270, %v333
    %vm336 = vcmp.eq.f32.partialorder %v270, 0.0
    %v337 = vand.u32 %v270, 2147483648
    %v338 = vsel %vm336, %v337, %v335
    %v339 = vrsqrt.pop %v273
    %v340 = vmul.f32 %v273, %v339
    %vm341 = vcmp.eq.f32.partialorder %v273, inf
    %v342 = vsel %vm341, %v273, %v340
    %vm343 = vcmp.eq.f32.partialorder %v273, 0.0
    %v344 = vand.u32 %v273, 2147483648
    %v345 = vsel %vm343, %v344, %v342
    %v346 = vrsqrt.pop %v276
    %v347 = vmul.f32 %v276, %v346
    %vm348 = vcmp.eq.f32.partialorder %v276, inf
    %v349 = vsel %vm348, %v276, %v347
    %vm350 = vcmp.eq.f32.partialorder %v276, 0.0
    %v351 = vand.u32 %v276, 2147483648
    %v352 = vsel %vm350, %v351, %v349
    %v353 = vrsqrt.pop %v279
    %v354 = vmul.f32 %v279, %v353
    %vm355 = vcmp.eq.f32.partialorder %v279, inf
    %v356 = vsel %vm355, %v279, %v354
    %vm357 = vcmp.eq.f32.partialorder %v279, 0.0
    %v358 = vand.u32 %v279, 2147483648
    %v359 = vsel %vm357, %v358, %v356
    %v360 = vrsqrt.pop %v282
    %v361 = vmul.f32 %v282, %v360
    %vm362 = vcmp.eq.f32.partialorder %v282, inf
    %v363 = vsel %vm362, %v282, %v361
    %vm364 = vcmp.eq.f32.partialorder %v282, 0.0
    %v365 = vand.u32 %v282, 2147483648
    %v366 = vsel %vm364, %v365, %v363
    %v367 = vrsqrt.pop %v285
    %v368 = vmul.f32 %v285, %v367
    %vm369 = vcmp.eq.f32.partialorder %v285, inf
    %v370 = vsel %vm369, %v285, %v368
    %vm371 = vcmp.eq.f32.partialorder %v285, 0.0
    %v372 = vand.u32 %v285, 2147483648
    %v373 = vsel %vm371, %v372, %v370
    %v374 = vrsqrt.pop %v288
    %v375 = vmul.f32 %v288, %v374
    %vm376 = vcmp.eq.f32.partialorder %v288, inf
    %v377 = vsel %vm376, %v288, %v375
    %vm378 = vcmp.eq.f32.partialorder %v288, 0.0
    %v379 = vand.u32 %v288, 2147483648
    %v380 = vsel %vm378, %v379, %v377
    %v381 = vrsqrt.pop %v291
    %v382 = vmul.f32 %v291, %v381
    %vm383 = vcmp.eq.f32.partialorder %v291, inf
    %v384 = vsel %vm383, %v291, %v382
    %vm385 = vcmp.eq.f32.partialorder %v291, 0.0
    %v386 = vand.u32 %v291, 2147483648
    %v387 = vsel %vm385, %v386, %v384
    %v388 = vrsqrt.pop %v294
    %v389 = vmul.f32 %v294, %v388
    %vm390 = vcmp.eq.f32.partialorder %v294, inf
    %v391 = vsel %vm390, %v294, %v389
    %vm392 = vcmp.eq.f32.partialorder %v294, 0.0
    %v393 = vand.u32 %v294, 2147483648
    %v394 = vsel %vm392, %v393, %v391
    %v395 = vrsqrt.pop %v297
    %v396 = vmul.f32 %v297, %v395
    %vm397 = vcmp.eq.f32.partialorder %v297, inf
    %v398 = vsel %vm397, %v297, %v396
    %vm399 = vcmp.eq.f32.partialorder %v297, 0.0
    %v400 = vand.u32 %v297, 2147483648
    %v401 = vsel %vm399, %v400, %v398
    %v402 = vrsqrt.pop %v300
    %v403 = vmul.f32 %v300, %v402
    %vm404 = vcmp.eq.f32.partialorder %v300, inf
    %v405 = vsel %vm404, %v300, %v403
    %vm406 = vcmp.eq.f32.partialorder %v300, 0.0
    %v407 = vand.u32 %v300, 2147483648
    %v408 = vsel %vm406, %v407, %v405
    %v409 = vrsqrt.pop %v303
    %v410 = vmul.f32 %v303, %v409
    %vm411 = vcmp.eq.f32.partialorder %v303, inf
    %v412 = vsel %vm411, %v303, %v410
    %vm413 = vcmp.eq.f32.partialorder %v303, 0.0
    %v414 = vand.u32 %v303, 2147483648
    %v415 = vsel %vm413, %v414, %v412
    %v432 = vlaneseq
    %v433 = vand.u32 %v432, 127
    %v434 = vlaneseq
    %v435 = vshrl.u32 %v434, 7
    %v436 = vsub.s32 %v433, %v435
    %v437 = vrot.slane %v310, %v436
    %v438 = vlaneseq
    %v439 = vshrl.u32 %v438, 7
    %v440 = vsub.s32 %v433, %v439
    %v441 = vrot.slane %v317, %v440
    %v442 = vlaneseq
    %v443 = vshrl.u32 %v442, 7
    %v444 = vsub.s32 %v433, %v443
    %v445 = vrot.slane %v324, %v444
    %v446 = vlaneseq
    %v447 = vshrl.u32 %v446, 7
    %v448 = vsub.s32 %v433, %v447
    %v449 = vrot.slane %v331, %v448
    %v450 = vlaneseq
    %v451 = vshrl.u32 %v450, 7
    %v452 = vsub.s32 %v433, %v451
    %v453 = vrot.slane %v338, %v452
    %v454 = vlaneseq
    %v455 = vshrl.u32 %v454, 7
    %v456 = vsub.s32 %v433, %v455
    %v457 = vrot.slane %v345, %v456
    %v458 = vlaneseq
    %v459 = vshrl.u32 %v458, 7
    %v460 = vsub.s32 %v433, %v459
    %v461 = vrot.slane %v352, %v460
    %v462 = vlaneseq
    %v463 = vshrl.u32 %v462, 7
    %v464 = vsub.s32 %v433, %v463
    %v465 = vrot.slane %v359, %v464
    %v466 = vlaneseq
    %v467 = vshrl.u32 %v466, 7
    %v468 = vsub.s32 %v433, %v467
    %v469 = vrot.slane %v366, %v468
    %v470 = vlaneseq
    %v471 = vshrl.u32 %v470, 7
    %v472 = vsub.s32 %v433, %v471
    %v473 = vrot.slane %v373, %v472
    %v474 = vlaneseq
    %v475 = vshrl.u32 %v474, 7
    %v476 = vsub.s32 %v433, %v475
    %v477 = vrot.slane %v380, %v476
    %v478 = vlaneseq
    %v479 = vshrl.u32 %v478, 7
    %v480 = vsub.s32 %v433, %v479
    %v481 = vrot.slane %v387, %v480
    %v482 = vlaneseq
    %v483 = vshrl.u32 %v482, 7
    %v484 = vsub.s32 %v433, %v483
    %v485 = vrot.slane %v394, %v484
    %v486 = vlaneseq
    %v487 = vshrl.u32 %v486, 7
    %v488 = vsub.s32 %v433, %v487
    %v489 = vrot.slane %v401, %v488
    %v490 = vlaneseq
    %v491 = vshrl.u32 %v490, 7
    %v492 = vsub.s32 %v433, %v491
    %v493 = vrot.slane %v408, %v492
    %v494 = vlaneseq
    %v495 = vshrl.u32 %v494, 7
    %v496 = vsub.s32 %v433, %v495
    %v497 = vrot.slane %v415, %v496
    %vm498 = vcmask 1041409
    %v499 = vsel %vm498, %v441, %v437
    %vm500 = vcmask 1042434
    %v501 = vsel %vm500, %v445, %v499
    %vm502 = vcmask 1043459
    %v503 = vsel %vm502, %v449, %v501
    %vm504 = vcmask 1044484
    %v505 = vsel %vm504, %v453, %v503
    %vm506 = vcmask 1045509
    %v507 = vsel %vm506, %v457, %v505
    %vm508 = vcmask 1046534
    %v509 = vsel %vm508, %v461, %v507
    %vm510 = vcmask 1047559
    %v511 = vsel %vm510, %v465, %v509
    %v512 = vsel %vm498, %v473, %v469
    %v513 = vsel %vm500, %v477, %v512
    %v514 = vsel %vm502, %v481, %v513
    %v515 = vsel %vm504, %v485, %v514
    %v516 = vsel %vm506, %v489, %v515
    %v517 = vsel %vm508, %v493, %v516
    %v518 = vsel %vm510, %v497, %v517
    %vm521 = vcmask 64512
    %522 = vst.msk [vmem:[%s2] sm:$0xff] %vm521, %v511
    %523 = vst.msk [vmem:[%s2 + $0x8] sm:$0xff] %vm521, %v518
    // Predicated region
    $region18: #{_hungarian_forward.2} parent=1 // pred_check
      _
    $region19: #{_hungarian_forward.2} parent=1 // pred_check_branch
      %525 = sbr.rel (0) target = $region21
    $region20: #{_hungarian_forward.2} parent=1 // pred_region
      _
    $region21: #{_hungarian_forward.2} parent=1 // pred_fallthru
      _
    // Predicated region
    $region22: #{_hungarian_forward.2} parent=1 // pred_check
      _
    $region23: #{_hungarian_forward.2} parent=1 // pred_check_branch
      %527 = sbr.rel (0) target = $region25
    $region24: #{_hungarian_forward.2} parent=1 // pred_region
      _
    $region25: #{_hungarian_forward.2} parent=1 // pred_fallthru
      _
    %528 = vsyncpa [#allocation3], 1
    %529 = vsyncpa [#allocation5], 1

// kernel: _hungarian_forward.3
$region0: #{_hungarian_forward.3}
  #allocation0 [shape = 'u32[]', space=smem, size = 0x4, offset = 0x4, fixed_abs, tag = 'smem constant byte address 0x4 - core index']
  #allocation1 [shape = 'u32[144,128]{1,0:T(1,128)}', space=vmem, size = 0x12000, scoped, tag = 'internal scratch']
  %s0 = inlined_call_operand.vmem [shape: f32[2,8,16], index: 0, kind: input, shape index: {}]
  %s1 = inlined_call_operand.vmem [shape: f32[2,8,16], index: 1, kind: input, shape index: {}]
  %s2 = inlined_call_operand.vmem [shape: f32[2,8,8], index: 2, kind: input, shape index: {}]
  %s3 = inlined_call_operand.hbm [shape: f32[1,1], index: 3, kind: output, shape index: {}]
  %s4 = sld [smem:[#allocation0]]
  $region22: #{_hungarian_forward.3} parent=0
    _
  %s6 = ssub.s32 1, %s4
  %s7 = scalar_select 0, %s6, %s4
  $region1: #{_hungarian_forward.3} parent=0
    #allocation2 [shape = 'u8[512]{0}', space=vmem, size = 0x400, scoped, tag = 'output window, operand 0, single buffered']
    #allocation3 [shape = 's32[1]{0}', space=sflag, size = 0x4, scoped, tag = 'scoped memory for _hungarian_forward.3']
    %8 = vsyncpa [#allocation3], 0
    // Predicated region
    $region2: #{_hungarian_forward.3} parent=1 // pred_check
      _
    $region3: #{_hungarian_forward.3} parent=1 // pred_check_branch
      %10 = sbr.rel (0) target = $region5
    $region4: #{_hungarian_forward.3} parent=1 // pred_region
      _
    $region5: #{_hungarian_forward.3} parent=1 // pred_fallthru
      _
    // Predicated region
    $region6: #{_hungarian_forward.3} parent=1 // pred_check
      _
    $region7: #{_hungarian_forward.3} parent=1 // pred_check_branch
      %12 = sbr.rel (0) target = $region9
    $region8: #{_hungarian_forward.3} parent=1 // pred_region
      _
    $region9: #{_hungarian_forward.3} parent=1 // pred_fallthru
      _
    // Predicated region
    $region10: #{_hungarian_forward.3} parent=1 // pred_check
      _
    $region11: #{_hungarian_forward.3} parent=1 // pred_check_branch
      %14 = sbr.rel (0) target = $region13
    $region12: #{_hungarian_forward.3} parent=1 // pred_region
      _
    $region13: #{_hungarian_forward.3} parent=1 // pred_fallthru
      _
    %v15 = vld [vmem:[%s0] sm:$0xff]
    %v16 = vld [vmem:[%s0 + $0x8] sm:$0xff]
    %v17 = vld [vmem:[%s1] sm:$0xff]
    %v18 = vld [vmem:[%s1 + $0x8] sm:$0xff]
    %v19 = vld [vmem:[%s2] sm:$0xff]
    %v20 = vld [vmem:[%s2 + $0x8] sm:$0xff]
    %v21 = vlaneseq
    %v22 = vshrl.u32 %v21, 7
    %v23 = vsub.s32 0, %v22
    %v24 = vrot.slane %v19, %v23
    %26 = vbcast.lane.b32.xlu0 %v24, 256
    %v27 = vpop.permute.xlu0 %26
    %v28 = vlaneseq
    %v29 = vshrl.u32 %v28, 7
    %v30 = vsub.s32 1, %v29
    %v31 = vrot.slane %v19, %v30
    %33 = vbcast.lane.b32.xlu0 %v31, 256
    %v34 = vpop.permute.xlu0 %33
    %v35 = vlaneseq
    %v36 = vshrl.u32 %v35, 7
    %v37 = vsub.s32 2, %v36
    %v38 = vrot.slane %v19, %v37
    %40 = vbcast.lane.b32.xlu0 %v38, 256
    %v41 = vpop.permute.xlu0 %40
    %v42 = vlaneseq
    %v43 = vshrl.u32 %v42, 7
    %v44 = vsub.s32 3, %v43
    %v45 = vrot.slane %v19, %v44
    %47 = vbcast.lane.b32.xlu0 %v45, 256
    %v48 = vpop.permute.xlu0 %47
    %v49 = vlaneseq
    %v50 = vshrl.u32 %v49, 7
    %v51 = vsub.s32 4, %v50
    %v52 = vrot.slane %v19, %v51
    %54 = vbcast.lane.b32.xlu0 %v52, 256
    %v55 = vpop.permute.xlu0 %54
    %v56 = vlaneseq
    %v57 = vshrl.u32 %v56, 7
    %v58 = vsub.s32 5, %v57
    %v59 = vrot.slane %v19, %v58
    %61 = vbcast.lane.b32.xlu0 %v59, 256
    %v62 = vpop.permute.xlu0 %61
    %v63 = vlaneseq
    %v64 = vshrl.u32 %v63, 7
    %v65 = vsub.s32 6, %v64
    %v66 = vrot.slane %v19, %v65
    %68 = vbcast.lane.b32.xlu0 %v66, 256
    %v69 = vpop.permute.xlu0 %68
    %v70 = vlaneseq
    %v71 = vshrl.u32 %v70, 7
    %v72 = vsub.s32 7, %v71
    %v73 = vrot.slane %v19, %v72
    %75 = vbcast.lane.b32.xlu0 %v73, 256
    %v76 = vpop.permute.xlu0 %75
    %v77 = vlaneseq
    %v78 = vshrl.u32 %v77, 7
    %v79 = vsub.s32 0, %v78
    %v80 = vrot.slane %v20, %v79
    %82 = vbcast.lane.b32.xlu0 %v80, 256
    %v83 = vpop.permute.xlu0 %82
    %v84 = vlaneseq
    %v85 = vshrl.u32 %v84, 7
    %v86 = vsub.s32 1, %v85
    %v87 = vrot.slane %v20, %v86
    %89 = vbcast.lane.b32.xlu0 %v87, 256
    %v90 = vpop.permute.xlu0 %89
    %v91 = vlaneseq
    %v92 = vshrl.u32 %v91, 7
    %v93 = vsub.s32 2, %v92
    %v94 = vrot.slane %v20, %v93
    %96 = vbcast.lane.b32.xlu0 %v94, 256
    %v97 = vpop.permute.xlu0 %96
    %v98 = vlaneseq
    %v99 = vshrl.u32 %v98, 7
    %v100 = vsub.s32 3, %v99
    %v101 = vrot.slane %v20, %v100
    %103 = vbcast.lane.b32.xlu0 %v101, 256
    %v104 = vpop.permute.xlu0 %103
    %v105 = vlaneseq
    %v106 = vshrl.u32 %v105, 7
    %v107 = vsub.s32 4, %v106
    %v108 = vrot.slane %v20, %v107
    %110 = vbcast.lane.b32.xlu0 %v108, 256
    %v111 = vpop.permute.xlu0 %110
    %v112 = vlaneseq
    %v113 = vshrl.u32 %v112, 7
    %v114 = vsub.s32 5, %v113
    %v115 = vrot.slane %v20, %v114
    %117 = vbcast.lane.b32.xlu0 %v115, 256
    %v118 = vpop.permute.xlu0 %117
    %v119 = vlaneseq
    %v120 = vshrl.u32 %v119, 7
    %v121 = vsub.s32 6, %v120
    %v122 = vrot.slane %v20, %v121
    %124 = vbcast.lane.b32.xlu0 %v122, 256
    %v125 = vpop.permute.xlu0 %124
    %v126 = vlaneseq
    %v127 = vshrl.u32 %v126, 7
    %v128 = vsub.s32 7, %v127
    %v129 = vrot.slane %v20, %v128
    %131 = vbcast.lane.b32.xlu0 %v129, 256
    %v132 = vpop.permute.xlu0 %131
    %v133 = vmul.f32 %v27, %v17
    %v134 = vmul.f32 %v34, %v17
    %v135 = vmul.f32 %v41, %v17
    %v136 = vmul.f32 %v48, %v17
    %v137 = vmul.f32 %v55, %v17
    %v138 = vmul.f32 %v62, %v17
    %v139 = vmul.f32 %v69, %v17
    %v140 = vmul.f32 %v76, %v17
    %v141 = vmul.f32 %v83, %v18
    %v142 = vmul.f32 %v90, %v18
    %v143 = vmul.f32 %v97, %v18
    %v144 = vmul.f32 %v104, %v18
    %v145 = vmul.f32 %v111, %v18
    %v146 = vmul.f32 %v118, %v18
    %v147 = vmul.f32 %v125, %v18
    %v148 = vmul.f32 %v132, %v18
    %vm149 = vcmask 130048
    %v150 = vsel %vm149, %v133, 0.0
    %v151 = vrot.slane %v150, 4
    %v152 = vadd.f32 %v150, %v151
    %v153 = vrot.slane %v152, 2
    %v154 = vadd.f32 %v152, %v153
    %v155 = vrot.slane %v154, 1
    %v156 = vadd.f32 %v154, %v155
    %v157 = vsel %vm149, %v134, 0.0
    %v158 = vrot.slane %v157, 4
    %v159 = vadd.f32 %v157, %v158
    %v160 = vrot.slane %v159, 2
    %v161 = vadd.f32 %v159, %v160
    %v162 = vrot.slane %v161, 1
    %v163 = vadd.f32 %v161, %v162
    %v164 = vsel %vm149, %v135, 0.0
    %v165 = vrot.slane %v164, 4
    %v166 = vadd.f32 %v164, %v165
    %v167 = vrot.slane %v166, 2
    %v168 = vadd.f32 %v166, %v167
    %v169 = vrot.slane %v168, 1
    %v170 = vadd.f32 %v168, %v169
    %v171 = vsel %vm149, %v136, 0.0
    %v172 = vrot.slane %v171, 4
    %v173 = vadd.f32 %v171, %v172
    %v174 = vrot.slane %v173, 2
    %v175 = vadd.f32 %v173, %v174
    %v176 = vrot.slane %v175, 1
    %v177 = vadd.f32 %v175, %v176
    %v178 = vsel %vm149, %v137, 0.0
    %v179 = vrot.slane %v178, 4
    %v180 = vadd.f32 %v178, %v179
    %v181 = vrot.slane %v180, 2
    %v182 = vadd.f32 %v180, %v181
    %v183 = vrot.slane %v182, 1
    %v184 = vadd.f32 %v182, %v183
    %v185 = vsel %vm149, %v138, 0.0
    %v186 = vrot.slane %v185, 4
    %v187 = vadd.f32 %v185, %v186
    %v188 = vrot.slane %v187, 2
    %v189 = vadd.f32 %v187, %v188
    %v190 = vrot.slane %v189, 1
    %v191 = vadd.f32 %v189, %v190
    %v192 = vsel %vm149, %v139, 0.0
    %v193 = vrot.slane %v192, 4
    %v194 = vadd.f32 %v192, %v193
    %v195 = vrot.slane %v194, 2
    %v196 = vadd.f32 %v194, %v195
    %v197 = vrot.slane %v196, 1
    %v198 = vadd.f32 %v196, %v197
    %v199 = vsel %vm149, %v140, 0.0
    %v200 = vrot.slane %v199, 4
    %v201 = vadd.f32 %v199, %v200
    %v202 = vrot.slane %v201, 2
    %v203 = vadd.f32 %v201, %v202
    %v204 = vrot.slane %v203, 1
    %v205 = vadd.f32 %v203, %v204
    %v206 = vsel %vm149, %v141, 0.0
    %v207 = vrot.slane %v206, 4
    %v208 = vadd.f32 %v206, %v207
    %v209 = vrot.slane %v208, 2
    %v210 = vadd.f32 %v208, %v209
    %v211 = vrot.slane %v210, 1
    %v212 = vadd.f32 %v210, %v211
    %v213 = vsel %vm149, %v142, 0.0
    %v214 = vrot.slane %v213, 4
    %v215 = vadd.f32 %v213, %v214
    %v216 = vrot.slane %v215, 2
    %v217 = vadd.f32 %v215, %v216
    %v218 = vrot.slane %v217, 1
    %v219 = vadd.f32 %v217, %v218
    %v220 = vsel %vm149, %v143, 0.0
    %v221 = vrot.slane %v220, 4
    %v222 = vadd.f32 %v220, %v221
    %v223 = vrot.slane %v222, 2
    %v224 = vadd.f32 %v222, %v223
    %v225 = vrot.slane %v224, 1
    %v226 = vadd.f32 %v224, %v225
    %v227 = vsel %vm149, %v144, 0.0
    %v228 = vrot.slane %v227, 4
    %v229 = vadd.f32 %v227, %v228
    %v230 = vrot.slane %v229, 2
    %v231 = vadd.f32 %v229, %v230
    %v232 = vrot.slane %v231, 1
    %v233 = vadd.f32 %v231, %v232
    %v234 = vsel %vm149, %v145, 0.0
    %v235 = vrot.slane %v234, 4
    %v236 = vadd.f32 %v234, %v235
    %v237 = vrot.slane %v236, 2
    %v238 = vadd.f32 %v236, %v237
    %v239 = vrot.slane %v238, 1
    %v240 = vadd.f32 %v238, %v239
    %v241 = vsel %vm149, %v146, 0.0
    %v242 = vrot.slane %v241, 4
    %v243 = vadd.f32 %v241, %v242
    %v244 = vrot.slane %v243, 2
    %v245 = vadd.f32 %v243, %v244
    %v246 = vrot.slane %v245, 1
    %v247 = vadd.f32 %v245, %v246
    %v248 = vsel %vm149, %v147, 0.0
    %v249 = vrot.slane %v248, 4
    %v250 = vadd.f32 %v248, %v249
    %v251 = vrot.slane %v250, 2
    %v252 = vadd.f32 %v250, %v251
    %v253 = vrot.slane %v252, 1
    %v254 = vadd.f32 %v252, %v253
    %v255 = vsel %vm149, %v148, 0.0
    %v256 = vrot.slane %v255, 4
    %v257 = vadd.f32 %v255, %v256
    %v258 = vrot.slane %v257, 2
    %v259 = vadd.f32 %v257, %v258
    %v260 = vrot.slane %v259, 1
    %v261 = vadd.f32 %v259, %v260
    %vm278 = vcmask 1041409
    %v279 = vsel %vm278, %v163, %v156
    %vm280 = vcmask 1042434
    %v281 = vsel %vm280, %v170, %v279
    %vm282 = vcmask 1043459
    %v283 = vsel %vm282, %v177, %v281
    %vm284 = vcmask 1044484
    %v285 = vsel %vm284, %v184, %v283
    %vm286 = vcmask 1045509
    %v287 = vsel %vm286, %v191, %v285
    %vm288 = vcmask 1046534
    %v289 = vsel %vm288, %v198, %v287
    %vm290 = vcmask 1047559
    %v291 = vsel %vm290, %v205, %v289
    %v292 = vsel %vm278, %v219, %v212
    %v293 = vsel %vm280, %v226, %v292
    %v294 = vsel %vm282, %v233, %v293
    %v295 = vsel %vm284, %v240, %v294
    %v296 = vsel %vm286, %v247, %v295
    %v297 = vsel %vm288, %v254, %v296
    %v298 = vsel %vm290, %v261, %v297
    %v301 = vsub.f32 %v15, %v291
    %v302 = vsub.f32 %v16, %v298
    %v303 = vmul.f32 %v301, %v301
    %v304 = vmul.f32 %v302, %v302
    %v305 = vlaneseq
    %v306 = vand.u32 %v305, 127
    %vm307 = vcmp.eq.s32.totalorder %v306, 15
    %v308 = vsel %vm307, %v15, 0.5
    %v309 = vsel %vm307, %v16, 0.5
    %v310 = vsel %vm307, %v291, 0.5
    %v311 = vsel %vm307, %v298, 0.5
    %v312 = vlog2.pop %v308
    %v313 = vmul.f32 %v312, 0.6931472
    %v314 = vlog2.pop %v309
    %v315 = vmul.f32 %v314, 0.6931472
    %v316 = vmax.f32 %v313, -100.0
    %v317 = vmax.f32 %v315, -100.0
    %v318 = vsub.f32 1.0, %v308
    %v319 = vsub.f32 1.0, %v309
    %v320 = vlog2.pop %v318
    %v321 = vmul.f32 %v320, 0.6931472
    %v322 = vlog2.pop %v319
    %v323 = vmul.f32 %v322, 0.6931472
    %v324 = vmax.f32 %v321, -100.0
    %v325 = vmax.f32 %v323, -100.0
    %v326 = vmul.f32 %v310, %v316
    %v327 = vmul.f32 %v311, %v317
    %v328 = vsub.f32 1.0, %v310
    %v329 = vsub.f32 1.0, %v311
    %v330 = vmul.f32 %v328, %v324
    %v331 = vmul.f32 %v329, %v325
    %v332 = vadd.f32 %v326, %v330
    %v333 = vadd.f32 %v327, %v331
    %v334 = vsub.f32 0.0, %v332
    %v335 = vsub.f32 0.0, %v333
    %v336 = vsel %vm307, %v334, 0.0
    %v337 = vsel %vm307, %v335, 0.0
    %v338 = vmul.f32 %v303, 0.0078125
    %v339 = vmul.f32 %v304, 0.0078125
    %v340 = vmul.f32 %v336, 0.125
    %v341 = vmul.f32 %v337, 0.125
    %v342 = vadd.f32 %v338, %v340
    %v343 = vadd.f32 %v339, %v341
    %v344 = vsel %vm149, %v342, 0.0
    %345 = vadd.xlane.f32.xlu0 %v344
    %v346 = vpop.xlane.xlu0 %345
    %v347 = vsel %vm149, %v343, 0.0
    %348 = vadd.xlane.f32.xlu0 %v347
    %v349 = vpop.xlane.xlu0 %348
    %v352 = vlaneseq
    %v353 = vshrl.u32 %v352, 7
    %v354 = vsub.s32 %v306, %v353
    %v355 = vrot.slane %v346, %v354
    %v356 = vlaneseq
    %v357 = vshrl.u32 %v356, 7
    %v358 = vsub.s32 %v306, %v357
    %v359 = vrot.slane %v349, %v358
    %v360 = vsel %vm278, %v359, %v355
    %vm362 = vcmask 58368
    %v363 = vsel %vm362, %v360, 0.0
    %364 = vadd.xlane.f32.xlu0 %v363
    %v365 = vpop.xlane.xlu0 %364
    %vm366 = vcmask 1041408
    %v367 = vsel %vm366, %v365, 0.0
    %v368 = vrot.slane %v367, 4
    %v369 = vadd.f32 %v367, %v368
    %v370 = vrot.slane %v369, 2
    %v371 = vadd.f32 %v369, %v370
    %v372 = vrot.slane %v371, 1
    %v373 = vadd.f32 %v371, %v372
    %v374 = vmul.f32 %v373, 0.25
    %vm375 = vcmask 0
    %376 = vst.msk [vmem:[#allocation2] sm:$0x1] %vm375, %v374
    // Predicated region
    $region14: #{_hungarian_forward.3} parent=1 // pred_check
      _
    $region15: #{_hungarian_forward.3} parent=1 // pred_check_branch
      %378 = sbr.rel (0) target = $region17
    $region16: #{_hungarian_forward.3} parent=1 // pred_region
      %s380 = ssub.s32 16, 16
      %381 = vsyncadd [#allocation3], %s380
      %s383 = sshll.u32 [#allocation2], 4
      %s384 = int_to_ptr.vmem [resolvable:$true] %s383
      %386 = dma.vmem_to_hbm [thread:$0]  %s384, 16, %s3, [#allocation3]
    $region17: #{_hungarian_forward.3} parent=1 // pred_fallthru
      _
    // Predicated region
    $region18: #{_hungarian_forward.3} parent=1 // pred_check
      _
    $region19: #{_hungarian_forward.3} parent=1 // pred_check_branch
      %388 = sbr.rel (0) target = $region21
    $region20: #{_hungarian_forward.3} parent=1 // pred_region
      %389 = dma.done [#allocation3], 16
    $region21: #{_hungarian_forward.3} parent=1 // pred_fallthru
      _
    %390 = vsyncpa [#allocation3], 1

</llo_original>
